<compile_context>
chip_gen: v6e
topology: v6e:2x2x1
jax: 0.10.0
libtpu: 0.0.40
codegen_flags: <defaults>
</compile_context>

<pallas_src>
import numpy as np
import jax
import jax.numpy as jnp
from jax import lax
from jax.experimental import pallas as pl
from jax.experimental.pallas import tpu as pltpu

_HIGHEST = jax.lax.Precision.HIGHEST


def _dot(a, b):
    return jnp.dot(a, b, preferred_element_type=jnp.float32, precision=_HIGHEST)


def _upsample_matrix(L, pad):
    """(L, 2L + 2*pad) matrix M such that x @ M is the zero-padded (by `pad`)
    linear x2 upsample of x, matching
    F.interpolate(scale_factor=2, mode='linear', align_corners=False)."""
    M = np.zeros((L, 2 * L + 2 * pad), dtype=np.float32)
    for j in range(2 * L):
        src = max((j + 0.5) / 2.0 - 0.5, 0.0)
        i0 = int(np.floor(src))
        frac = src - i0
        i1 = min(i0 + 1, L - 1)
        M[i0, pad + j] += 1.0 - frac
        M[i1, pad + j] += frac
    return jnp.asarray(M)


def _pick_nb(n, per_sample_bytes):
    """Samples per grid step: large enough to amortize the ~0.35us/step
    overhead, capped so the grid keeps >=2 steps (both v7x TensorCores busy)."""
    target = max(1, (2 * 1024 * 1024) // max(per_sample_bytes, 1))
    nb = max(1, min(n, target, 8, max(1, n // 2)))
    while n % nb:
        nb -= 1
    return nb


def _fold_bn(w, b, gamma, beta, mean, var, eps=1e-5):
    """Fold eval-mode BatchNorm1d into the preceding conv's weight/bias."""
    scale = gamma / jnp.sqrt(var + eps)
    return w * scale[:, None, None], (b - mean) * scale + beta


def _fused_block(x, wa, ba, wb=None, bb=None, *, upsample, Ka, relu_a,
                 Kb=0, relu_b=True):
    """One fused decoder stage, channels-first (N, C, L) in and out:
       [linear x2 upsample] -> conv(Ka)+bias(+ReLU) -> [conv(Kb)+bias(+ReLU)]
    Padding, upsampling and the intermediate activation never leave VMEM."""
    double = wb is not None
    N, C_in, L_in = x.shape
    C_a = wa.shape[0]
    assert wa.shape == (C_a, C_in, Ka)
    pad_a = Ka // 2
    L_up = 2 * L_in if upsample else L_in
    Lp_a = L_up + 2 * pad_a          # padded length feeding conv A
    L_a = Lp_a - Ka + 1              # conv A output length (== L_up, odd K)
    if double:
        C_b = wb.shape[0]
        assert wb.shape == (C_b, C_a, Kb)
        pad_b = Kb // 2
        Lp_b = L_a + 2 * pad_b
        L_b = Lp_b - Kb + 1
    else:
        C_b, pad_b, Lp_b, L_b = C_a, 0, L_a, L_a

    C_out = C_b if double else C_a
    L_out = L_b if double else L_a

    # Pack each conv weight so the whole conv can be ONE MXU matmul with
    # contraction depth K*C_in (rhs row k*C_in + ci  <->  tap k, channel ci).
    wa_p = jnp.transpose(wa, (0, 2, 1)).reshape(C_a, Ka * C_in)
    ba_p = ba.reshape(C_a, 1)
    if double:
        wb_p = jnp.transpose(wb, (0, 2, 1)).reshape(C_b, Kb * C_a)
        bb_p = bb.reshape(C_b, 1)

    use_xpad = upsample or Ka > 1          # padded staging buffer needed?
    use_midpad = double and Kb > 1

    Nb = _pick_nb(N, 4 * (C_in * L_in + C_out * L_out))
    grid = (N // Nb,)
    u_mat = _upsample_matrix(L_in, pad_a) if upsample else None

    def kernel(*args):
        it = iter(args)
        x_ref = next(it)
        u_ref = next(it) if upsample else None
        wa_ref, ba_ref = next(it), next(it)
        wb_ref, bb_ref = (next(it), next(it)) if double else (None, None)
        o_ref = next(it)
        xpad_ref = next(it) if use_xpad else None
        midpad_ref = next(it) if use_midpad else None

        def conv_from_padded(w_ref, pad_ref, c_tap, K, L):
            # K shifted lane-slices of the zero-padded signal.
            taps = [pad_ref[:, pl.ds(k, L)] for k in range(K)]
            if K == 1:
                return _dot(w_ref[...], taps[0])
            if c_tap % 8 == 0:
                # sublane-aligned -> merge taps into a single MXU matmul
                return _dot(w_ref[...], jnp.concatenate(taps, axis=0))
            out = _dot(w_ref[:, pl.ds(0, c_tap)], taps[0])
            for k in range(1, K):
                out = out + _dot(w_ref[:, pl.ds(k * c_tap, c_tap)], taps[k])
            return out

        # Zero the padding halo of the staging buffers (interior is fully
        # overwritten per sample; the upsample matrix bakes in its own zeros).
        if use_xpad and (not upsample) and pad_a > 0:
            xpad_ref[...] = jnp.zeros_like(xpad_ref)
        if use_midpad and pad_b > 0:
            midpad_ref[...] = jnp.zeros_like(midpad_ref)

        for s in range(Nb):                      # static; Nb is small
            xs = x_ref[s]                        # (C_in, L_in), L on lanes
            if upsample:
                # fused linear x2 upsample + zero pad as one small matmul
                xpad_ref[...] = _dot(xs, u_ref[...])
            elif use_xpad:
                xpad_ref[:, pl.ds(pad_a, L_in)] = xs

            if use_xpad:
                ya = conv_from_padded(wa_ref, xpad_ref, C_in, Ka, L_a)
            else:                                # 1x1 conv: no padding needed
                ya = _dot(wa_ref[...], xs)
            ya = ya + ba_ref[...]
            if relu_a:
                ya = jnp.maximum(ya, 0.0)

            if double:
                if use_midpad:
                    midpad_ref[:, pl.ds(pad_b, L_a)] = ya
                    yb = conv_from_padded(wb_ref, midpad_ref, C_a, Kb, L_b)
                else:
                    yb = _dot(wb_ref[...], ya)
                yb = yb + bb_ref[...]
                if relu_b:
                    yb = jnp.maximum(yb, 0.0)
                out = yb
            else:
                out = ya
            o_ref[s] = out.astype(o_ref.dtype)   # lane-dense (L on lanes)

    inputs = [x]
    in_specs = [pl.BlockSpec((Nb, C_in, L_in), lambda n: (n, 0, 0))]
    if upsample:
        inputs.append(u_mat)
        in_specs.append(pl.BlockSpec(u_mat.shape, lambda n: (0, 0)))
    inputs += [wa_p, ba_p]
    in_specs += [pl.BlockSpec(wa_p.shape, lambda n: (0, 0)),
                 pl.BlockSpec(ba_p.shape, lambda n: (0, 0))]
    if double:
        inputs += [wb_p, bb_p]
        in_specs += [pl.BlockSpec(wb_p.shape, lambda n: (0, 0)),
                     pl.BlockSpec(bb_p.shape, lambda n: (0, 0))]

    scratch = []
    if use_xpad:
        scratch.append(pltpu.VMEM((C_in, Lp_a), jnp.float32))
    if use_midpad:
        scratch.append(pltpu.VMEM((C_a, Lp_b), jnp.float32))

    return pl.pallas_call(
        kernel,
        out_shape=jax.ShapeDtypeStruct((N, C_out, L_out), x.dtype),
        grid_spec=pltpu.PrefetchScalarGridSpec(
            num_scalar_prefetch=0,
            grid=grid,
            in_specs=in_specs,
            out_specs=pl.BlockSpec((Nb, C_out, L_out), lambda n: (n, 0, 0)),
            scratch_shapes=scratch,
        ),
        compiler_params=pltpu.CompilerParams(
            dimension_semantics=("parallel",),
            vmem_limit_bytes=32 * 1024 * 1024,
        ),
    )(*inputs)


# ---------------------------------------------------------------------------
# Full ECGDecoder forward, built from the fused blocks above.
# ---------------------------------------------------------------------------
def _pallas_upblock(x, up):
    (w1, b1), (w2, b2), k = up["conv1"], up["conv2"], up["k"]
    return _fused_block(x, w1, b1, w2, b2, upsample=True, Ka=k, Kb=k,
                        relu_a=True, relu_b=True)


def ecg_decoder_pallas(x, p):
    w, b = p["bottleneck"]
    x = _fused_block(x, w, b, upsample=False, Ka=1, relu_a=True)
    x = _pallas_upblock(x, p["up1"])
    x = _pallas_upblock(x, p["up2"])
    x = _pallas_upblock(x, p["up3"])
    w5, b5 = _fold_bn(*p["conv5"], *p["bn5"])
    x = _fused_block(x, w5, b5, *p["conv6"], upsample=False, Ka=3, Kb=3,
                     relu_a=True, relu_b=True)
    x = _pallas_upblock(x, p["up4"])
    x = _pallas_upblock(x, p["up5"])
    w7, b7 = _fold_bn(*p["conv7"], *p["bn7"])
    x = _fused_block(x, w7, b7, *p["conv8"], upsample=False, Ka=3, Kb=3,
                     relu_a=True, relu_b=True)
    x = _pallas_upblock(x, p["up6"])
    x = _pallas_upblock(x, p["up7"])
    w9, b9 = _fold_bn(*p["conv9"], *p["bn9"])
    x = _fused_block(x, w9, b9, *p["conv10"], upsample=False, Ka=3, Kb=3,
                     relu_a=True, relu_b=True)
    wo, bo = p["output"]
    return _fused_block(x, wo, bo, upsample=False, Ka=1, relu_a=False)


# ---------------------------------------------------------------------------
# Parameter init + pure-JAX reference (same math as the PyTorch module).
# ---------------------------------------------------------------------------
def _conv_init(key, c_in, c_out, k):
    kw, kb = jax.random.split(key)
    std = float(np.sqrt(2.0 / (c_in * k)))
    w = std * jax.random.normal(kw, (c_out, c_in, k), jnp.float32)
    b = 0.01 * jax.random.normal(kb, (c_out,), jnp.float32)
    return w, b


def _bn_init(key, c):
    k1, k2, k3, k4 = jax.random.split(key, 4)
    gamma = 1.0 + 0.1 * jax.random.normal(k1, (c,), jnp.float32)
    beta = 0.1 * jax.random.normal(k2, (c,), jnp.float32)
    mean = 0.1 * jax.random.normal(k3, (c,), jnp.float32)
    var = jax.random.uniform(k4, (c,), jnp.float32, 0.5, 1.5)
    return gamma, beta, mean, var


def init_ecg_decoder(key, channels, bottleneck=16):
    c = channels
    keys = iter(jax.random.split(key, 32))
    p = {"bottleneck": _conv_init(next(keys), bottleneck, c[6], 1)}
    up_cfg = [(c[6], c[6], 3), (c[6], c[5], 3), (c[5], c[4], 3),
              (c[4], c[3], 5), (c[3], c[2], 5), (c[2], c[2], 7), (c[2], c[2], 7)]
    for i, (ci, co, k) in enumerate(up_cfg, start=1):
        p[f"up{i}"] = {"k": k,
                       "conv1": _conv_init(next(keys), ci, co, k),
                       "conv2": _conv_init(next(keys), co, co, k)}
    p["conv5"] = _conv_init(next(keys), c[4], c[4], 3)
    p["bn5"] = _bn_init(next(keys), c[4])
    p["conv6"] = _conv_init(next(keys), c[4], c[4], 3)
    p["conv7"] = _conv_init(next(keys), c[2], c[2], 3)
    p["bn7"] = _bn_init(next(keys), c[2])
    p["conv8"] = _conv_init(next(keys), c[2], c[2], 3)
    p["conv9"] = _conv_init(next(keys), c[2], c[1], 3)
    p["bn9"] = _bn_init(next(keys), c[1])
    p["conv10"] = _conv_init(next(keys), c[1], c[0], 3)
    p["output"] = _conv_init(next(keys), c[0], 2, 1)
    return p


def _ref_conv(x, w, b, pad):
    y = lax.conv_general_dilated(
        x, w, window_strides=(1,), padding=[(pad, pad)],
        dimension_numbers=("NCH", "OIH", "NCH"), precision=_HIGHEST)
    return y + b[None, :, None]


def _ref_bn(x, bn, eps=1e-5):
    gamma, beta, mean, var = bn
    inv = (gamma / jnp.sqrt(var + eps))[None, :, None]
    return (x - mean[None, :, None]) * inv + beta[None, :, None]


def _ref_upsample(x):
    # F.interpolate(scale_factor=2, mode='linear', align_corners=False)
    xl = jnp.concatenate([x[..., :1], x[..., :-1]], axis=-1)
    xr = jnp.concatenate([x[..., 1:], x[..., -1:]], axis=-1)
    even = 0.25 * xl + 0.75 * x
    odd = 0.75 * x + 0.25 * xr
    y = jnp.stack([even, odd], axis=-1)
    return y.reshape(x.shape[0], x.shape[1], 2 * x.shape[2])


def _ref_conv_block(x, wb_pair, k, relu=True, bn=None):
    w, b = wb_pair
    y = _ref_conv(x, w, b, k // 2)
    if bn is not None:
        y = _ref_bn(y, bn)
    if relu:
        y = jnp.maximum(y, 0.0)
    return y


def _ref_upblock(x, up):
    x = _ref_upsample(x)
    x = _ref_conv_block(x, up["conv1"], up["k"])
    x = _ref_conv_block(x, up["conv2"], up["k"])
    return x


def ecg_decoder_ref(x, p):
    x = _ref_conv_block(x, p["bottleneck"], 1)
    x = _ref_upblock(x, p["up1"])
    x = _ref_upblock(x, p["up2"])
    x = _ref_upblock(x, p["up3"])
    x = _ref_conv_block(x, p["conv5"], 3, bn=p["bn5"])
    x = _ref_conv_block(x, p["conv6"], 3)
    x = _ref_upblock(x, p["up4"])
    x = _ref_upblock(x, p["up5"])
    x = _ref_conv_block(x, p["conv7"], 3, bn=p["bn7"])
    x = _ref_conv_block(x, p["conv8"], 3)
    x = _ref_upblock(x, p["up6"])
    x = _ref_upblock(x, p["up7"])
    x = _ref_conv_block(x, p["conv9"], 3, bn=p["bn9"])
    x = _ref_conv_block(x, p["conv10"], 3)
    x = _ref_conv_block(x, p["output"], 1, relu=False)
    return x


if __name__ == "__main__":
    # channels[0..6]; bottleneck=16; small but exercises every layer type.
    channels = [4, 4, 8, 8, 8, 16, 16]
    bottleneck = 16
    N, L0 = 2, 8

    key = jax.random.PRNGKey(0)
    kp, kx = jax.random.split(key)
    params = init_ecg_decoder(kp, channels, bottleneck)
    x = jax.random.normal(kx, (N, bottleneck, L0), jnp.float32)

    out = ecg_decoder_pallas(x, params)
    out = jax.block_until_ready(out)

    ref = ecg_decoder_ref(x, params)
    assert out.shape == ref.shape == (N, 2, L0 * 2 ** 7), (out.shape, ref.shape)
    assert jnp.allclose(out, ref, atol=1e-3, rtol=1e-3), \
        float(jnp.max(jnp.abs(out - ref)))
    print("KERNEL_OK")
</pallas_src>

<mosaic_0001>
module attributes {stable_mosaic.version = 11 : i64} {
  func.func @kernel(%arg0: i32, %arg1: memref<1x16x8xf32, #tpu.memory_space<vmem>>, %arg2: memref<16x16xf32, #tpu.memory_space<vmem>>, %arg3: memref<16x1xf32, #tpu.memory_space<vmem>>, %arg4: memref<1x16x8xf32, #tpu.memory_space<vmem>>) attributes {dimension_semantics = [#tpu.dimension_semantics<parallel>], iteration_bounds = array<i64: 2>, scalar_prefetch = 0 : i64, scratch_operands = 0 : i64, tpu.core_type = #tpu.core_type<tc>, window_params = [{transform_indices = @transform_0, window_bounds = array<i64: 1, 16, 8>}, {pipeline_mode = #tpu.pipeline_mode<synchronous>, transform_indices = @transform_1, window_bounds = array<i64: 16, 16>}, {pipeline_mode = #tpu.pipeline_mode<synchronous>, transform_indices = @transform_2, window_bounds = array<i64: 16, 1>}, {transform_indices = @transform_3, window_bounds = array<i64: 1, 16, 8>}]} {
    %c0 = arith.constant 0 : index
    %c0_0 = arith.constant 0 : index
    %c0_1 = arith.constant 0 : index
    %0 = vector.load %arg1[%c0, %c0_0, %c0_1] : memref<1x16x8xf32, #tpu.memory_space<vmem>>, vector<1x16x8xf32>
    %1 = vector.shape_cast %0 : vector<1x16x8xf32> to vector<16x8xf32>
    %c0_2 = arith.constant 0 : index
    %c0_3 = arith.constant 0 : index
    %2 = vector.load %arg2[%c0_2, %c0_3] : memref<16x16xf32, #tpu.memory_space<vmem>>, vector<16x16xf32>
    %cst = arith.constant dense<0.000000e+00> : vector<16x8xf32>
    %3 = tpu.matmul %2, %1, %cst {dimension_numbers = #tpu.dot_dimension_numbers<[1], [0], [0], [1], [0, 0, 1, 1], [], []>, precision = #tpu.contract_precision<fp32>} : vector<16x16xf32>, vector<16x8xf32>, vector<16x8xf32> -> vector<16x8xf32>
    %c0_4 = arith.constant 0 : index
    %c0_5 = arith.constant 0 : index
    %4 = vector.load %arg3[%c0_4, %c0_5] : memref<16x1xf32, #tpu.memory_space<vmem>>, vector<16x1xf32>
    %5 = vector.broadcast %4 : vector<16x1xf32> to vector<16x8xf32>
    %6 = arith.addf %3, %5 : vector<16x8xf32>
    %cst_6 = arith.constant 0.000000e+00 : f32
    %7 = vector.broadcast %cst_6 : f32 to vector<16x8xf32>
    %8 = arith.maximumf %6, %7 : vector<16x8xf32>
    %c0_7 = arith.constant 0 : index
    %c0_8 = arith.constant 0 : index
    %c0_9 = arith.constant 0 : index
    %9 = vector.load %arg4[%c0_7, %c0_8, %c0_9] : memref<1x16x8xf32, #tpu.memory_space<vmem>>, vector<1x16x8xf32>
    %10 = vector.shape_cast %9 : vector<1x16x8xf32> to vector<16x8xf32>
    %11 = vector.shape_cast %8 : vector<16x8xf32> to vector<1x16x8xf32>
    tpu.vector_store %arg4[%c0_7, %c0_8, %c0_9], %11 {strides = array<i32>} : memref<1x16x8xf32, #tpu.memory_space<vmem>>, vector<1x16x8xf32>,
    return
  }
  func.func @transform_0(%arg0: i32) -> (i32, i32, i32) {
    %c0_i32 = arith.constant 0 : i32
    %c0_i32_0 = arith.constant 0 : i32
    %c0_i32_1 = arith.constant 0 : i32
    return %arg0, %c0_i32, %c0_i32_0 : i32, i32, i32
  }
  func.func @transform_1(%arg0: i32) -> (i32, i32) {
    %c0_i32 = arith.constant 0 : i32
    %c0_i32_0 = arith.constant 0 : i32
    %c0_i32_1 = arith.constant 0 : i32
    return %c0_i32, %c0_i32_0 : i32, i32
  }
  func.func @transform_2(%arg0: i32) -> (i32, i32) {
    %c0_i32 = arith.constant 0 : i32
    %c0_i32_0 = arith.constant 0 : i32
    %c0_i32_1 = arith.constant 0 : i32
    return %c0_i32, %c0_i32_0 : i32, i32
  }
  func.func @transform_3(%arg0: i32) -> (i32, i32, i32) {
    %c0_i32 = arith.constant 0 : i32
    %c0_i32_0 = arith.constant 0 : i32
    %c0_i32_1 = arith.constant 0 : i32
    return %arg0, %c0_i32, %c0_i32_0 : i32, i32, i32
  }
}

</mosaic_0001>

<llo_original>
// kernel: tpu_custom_call.1
$region0: #{tpu_custom_call.1}
  #allocation0 [shape = 'u32[]', space=smem, size = 0x4, offset = 0x4, fixed_abs, tag = 'smem constant byte address 0x4 - core index']
  #allocation1 [shape = 'u32[144,128]{1,0:T(1,128)}', space=vmem, size = 0x12000, scoped, tag = 'internal scratch']
  %s0 = inlined_call_operand.vmem [shape: f32[2,16,8], index: 0, kind: input, shape index: {}]
  %s1 = inlined_call_operand.vmem [shape: f32[16,16], index: 1, kind: input, shape index: {}]
  %s2 = inlined_call_operand.vmem [shape: f32[16,1], index: 2, kind: input, shape index: {}]
  %s3 = inlined_call_operand.vmem [shape: f32[2,16,8], index: 3, kind: output, shape index: {}]
  %s4 = sld [smem:[#allocation0]]
  $region45: #{tpu_custom_call.1} parent=0
    _
  %s6 = ssub.s32 1, %s4
  %s7 = scalar_select 0, %s6, %s4
  loop: start=0, step=1, limit=4
  $region2: #{tpu_custom_call.1} parent=0 // loop_pre_header
    _
  $region3: #{tpu_custom_call.1} parent=0 // loop_header
    %s9 = sphi 0, %s13
    %p10 = scmp.ge.s32.totalorder %s9, 4
    %s19 = sphi 0, %s21
    %s22 = sphi 0, %s19
    %s23 = sphi 0, %s22
    %s39 = sphi 0, %s23
    %s43 = sphi 0, %s43
    %s45 = sphi 0, %s43
    %s46 = sphi 0, %s45
    %s60 = sphi 0, %s46
    %s64 = sphi 0, %s64
    %s66 = sphi 0, %s64
    %s67 = sphi 0, %s66
    %s81 = sphi 0, %s67
    %s87 = sphi 0, %s89
    %s90 = sphi 0, %s87
    %s91 = sphi 0, %s90
    %s107 = sphi 0, %s91
  $region4: #{tpu_custom_call.1} parent=0 // loop_header_branch
    %12 = sbr.rel (%p10) target = $region8
  $region5: #{tpu_custom_call.1} parent=0 // loop_body
    %s14 = ssub.s32 %s9, 1
    %s15 = ssub.s32 %s9, 2
    %s16 = sadd.s32 %s9, 1
    %s17 = ssub.s32 %s9, %s16
    %p18 = scmp.eq.s32.totalorder %s17, 0
    %s20 = sadd.s32 %s19, 1
    %s21 = scalar_select %p18, %s19, %s20
    %p24 = pneg %p18
    %p25 = scmp.eq.s32.totalorder %s9, 1
    %p26 = por %p24, %p25
    %p27 = scmp.ne.s32.totalorder %s19, %s22
    %p28 = scmp.eq.s32.totalorder %s9, 0
    %p29 = por %p27, %p28
    %p30 = scmp.ne.s32.totalorder %s19, %s22
    %p31 = scmp.eq.s32.totalorder %s14, 1
    %p32 = por %p30, %p31
    %p33 = scmp.ne.s32.totalorder %s22, %s23
    %p34 = scmp.eq.s32.totalorder %s14, 0
    %p35 = por %p33, %p34
    %p36 = scmp.ne.s32.totalorder %s22, %s23
    %p37 = scmp.eq.s32.totalorder %s15, 1
    %p38 = por %p36, %p37
    %p40 = scmp.ne.s32.totalorder %s23, %s39
    %p41 = scmp.eq.s32.totalorder %s15, 0
    %p42 = por %p40, %p41
    %s44 = sadd.s32 %s43, 1
    %p47 = scmp.eq.s32.totalorder %s9, 1
    %p48 = scmp.ne.s32.totalorder %s43, %s45
    %p49 = scmp.eq.s32.totalorder %s9, 0
    %p50 = por %p48, %p49
    %p51 = scmp.ne.s32.totalorder %s43, %s45
    %p52 = scmp.eq.s32.totalorder %s14, 1
    %p53 = por %p51, %p52
    %p54 = scmp.ne.s32.totalorder %s45, %s46
    %p55 = scmp.eq.s32.totalorder %s14, 0
    %p56 = por %p54, %p55
    %p57 = scmp.ne.s32.totalorder %s45, %s46
    %p58 = scmp.eq.s32.totalorder %s15, 1
    %p59 = por %p57, %p58
    %p61 = scmp.ne.s32.totalorder %s46, %s60
    %p62 = scmp.eq.s32.totalorder %s15, 0
    %p63 = por %p61, %p62
    %s65 = sadd.s32 %s64, 1
    %p68 = scmp.eq.s32.totalorder %s9, 1
    %p69 = scmp.ne.s32.totalorder %s64, %s66
    %p70 = scmp.eq.s32.totalorder %s9, 0
    %p71 = por %p69, %p70
    %p72 = scmp.ne.s32.totalorder %s64, %s66
    %p73 = scmp.eq.s32.totalorder %s14, 1
    %p74 = por %p72, %p73
    %p75 = scmp.ne.s32.totalorder %s66, %s67
    %p76 = scmp.eq.s32.totalorder %s14, 0
    %p77 = por %p75, %p76
    %p78 = scmp.ne.s32.totalorder %s66, %s67
    %p79 = scmp.eq.s32.totalorder %s15, 1
    %p80 = por %p78, %p79
    %p82 = scmp.ne.s32.totalorder %s67, %s81
    %p83 = scmp.eq.s32.totalorder %s15, 0
    %p84 = por %p82, %p83
    %s85 = ssub.s32 %s9, %s16
    %p86 = scmp.eq.s32.totalorder %s85, 0
    %s88 = sadd.s32 %s87, 1
    %s89 = scalar_select %p86, %s87, %s88
    %p92 = pneg %p86
    %p93 = scmp.eq.s32.totalorder %s9, 1
    %p94 = por %p92, %p93
    %p95 = scmp.ne.s32.totalorder %s87, %s90
    %p96 = scmp.eq.s32.totalorder %s9, 0
    %p97 = por %p95, %p96
    %p98 = scmp.ne.s32.totalorder %s87, %s90
    %p99 = scmp.eq.s32.totalorder %s14, 1
    %p100 = por %p98, %p99
    %p101 = scmp.ne.s32.totalorder %s90, %s91
    %p102 = scmp.eq.s32.totalorder %s14, 0
    %p103 = por %p101, %p102
    %p104 = scmp.ne.s32.totalorder %s90, %s91
    %p105 = scmp.eq.s32.totalorder %s15, 1
    %p106 = por %p104, %p105
    %p108 = scmp.ne.s32.totalorder %s91, %s107
    %p109 = scmp.eq.s32.totalorder %s15, 0
    %p110 = por %p108, %p109
    %p111 = scmp.le.s32.totalorder 1, %s9
    %p112 = scmp.lt.s32.totalorder %s9, 3
    %p113 = pnand %p111, %p112
    %p114 = pneg %p113
    // Predicated region
    $region9: #{tpu_custom_call.1} parent=5 // pred_check
      _
    $region10: #{tpu_custom_call.1} parent=5 // pred_check_branch
      %116 = sbr.rel (%p113) target = $region12
    $region11: #{tpu_custom_call.1} parent=5 // pred_region
      %s117 = ssub.s32 %s9, 1
      // Predicated region
      $region13: #{tpu_custom_call.1} parent=11 // pred_check
        %p118 = pneg %p56
      $region14: #{tpu_custom_call.1} parent=11 // pred_check_branch
        %120 = sbr.rel (%p118) target = $region16
      $region15: #{tpu_custom_call.1} parent=11 // pred_region
        _
      $region16: #{tpu_custom_call.1} parent=11 // pred_fallthru
        _
      // Predicated region
      $region17: #{tpu_custom_call.1} parent=11 // pred_check
        %p121 = pneg %p77
      $region18: #{tpu_custom_call.1} parent=11 // pred_check_branch
        %123 = sbr.rel (%p121) target = $region20
      $region19: #{tpu_custom_call.1} parent=11 // pred_region
        _
      $region20: #{tpu_custom_call.1} parent=11 // pred_fallthru
        _
    $region12: #{tpu_custom_call.1} parent=5 // pred_fallthru
      _
    %p124 = scmp.lt.s32.totalorder %s9, 2
    // Predicated region
    $region21: #{tpu_custom_call.1} parent=5 // pred_check
      %p125 = pneg %p124
    $region22: #{tpu_custom_call.1} parent=5 // pred_check_branch
      %127 = sbr.rel (%p125) target = $region24
    $region23: #{tpu_custom_call.1} parent=5 // pred_region
      // Predicated region
      $region25: #{tpu_custom_call.1} parent=23 // pred_check
        %p128 = pneg %p29
      $region26: #{tpu_custom_call.1} parent=23 // pred_check_branch
        %130 = sbr.rel (%p128) target = $region28
      $region27: #{tpu_custom_call.1} parent=23 // pred_region
        %p131 = scmp.lt.s32.totalorder %s9, 1
        %s132 = scalar_select %p131, %s9, 1
        %s133 = smul.addr %s132, 2
        %s134 = smul.addr %s133, 8
        %s135 = scalar_lea.vmem %s0, %s134
      $region28: #{tpu_custom_call.1} parent=23 // pred_fallthru
        _
    $region24: #{tpu_custom_call.1} parent=5 // pred_fallthru
      _
    %p136 = scmp.le.s32.totalorder 1, %s9
    %p137 = scmp.lt.s32.totalorder %s9, 3
    %p138 = pnand %p136, %p137
    %p139 = pneg %p138
    // Predicated region
    $region29: #{tpu_custom_call.1} parent=5 // pred_check
      _
    $region30: #{tpu_custom_call.1} parent=5 // pred_check_branch
      %141 = sbr.rel (%p138) target = $region32
    $region31: #{tpu_custom_call.1} parent=5 // pred_region
      %s142 = ssub.s32 %s9, 1
      %p143 = scmp.lt.s32.totalorder %s14, 1
      %s144 = scalar_select %p143, %s14, 1
      %s145 = smul.addr %s144, 2
      %s146 = smul.addr %s145, 8
      %s147 = scalar_lea.vmem %s0, %s146
      %p148 = pneg %p35
      %p149 = pneg %p32
      %p150 = pneg %p56
      %p151 = pneg %p53
      %p152 = pneg %p77
      %p153 = pneg %p74
      %p154 = pneg %p103
      %p155 = pneg %p100
      %p156 = scmp.lt.s32.totalorder %s14, 1
      %s157 = scalar_select %p156, %s14, 1
      %s158 = smul.addr %s157, 2
      %s159 = smul.addr %s158, 8
      %s160 = scalar_lea.vmem %s3, %s159
      %p161 = scmp.lt.s32.totalorder %s14, 1
      %s162 = scalar_select %p161, %s14, 1
      %s163 = smul.addr %s162, 2
      %s164 = smul.addr %s163, 8
      %s165 = scalar_lea.vmem %s0, %s164
      %p166 = scmp.lt.s32.totalorder %s14, 1
      %s167 = scalar_select %p166, %s14, 1
      %s168 = smul.addr %s167, 2
      %s169 = smul.addr %s168, 8
      %s170 = scalar_lea.vmem %s3, %s169
      %v171 = vld [vmem:[%s165] sm:$0xff]
      %v172 = vld [vmem:[%s165 + $0x8] sm:$0xff]
      %v173 = vld [vmem:[%s1] sm:$0xff]
      %v174 = vld [vmem:[%s1 + $0x8] sm:$0xff]
      %v175 = vld [vmem:[%s2] sm:$0xff]
      %v176 = vld [vmem:[%s2 + $0x8] sm:$0xff]
      %178 = vset.pattern.permute.xlu0 0
      %179 = vperm.xlu0 %178, %v175
      %v180 = vpop.permute.xlu0 %179
      %183 = vset.pattern.permute.xlu0 0
      %184 = vperm.xlu0 %183, %v176
      %v185 = vpop.permute.xlu0 %184
      %vm187 = vcmask 130048
      %v189 = vsel %vm187, %v173, 0
      %v192 = vsel %vm187, %v174, 0
      %194 = vmatprep.subr.mxu0 0.0
      %195 = vmatpush1.msra.mxu0 0.0
      %196 = vmatprep.subr.mxu0 0.0
      %197 = vmatpush1.msra.mxu0 0.0
      %198 = vmatprep.subr.mxu0 0.0
      %199 = vmatpush1.msra.mxu0 0.0
      %200 = vmatprep.subr.mxu0 0.0
      %201 = vmatpush1.msra.mxu0 0.0
      %202 = vmatprep.subr.mxu0 0.0
      %203 = vmatpush1.msra.mxu0 0.0
      %204 = vmatprep.subr.mxu0 0.0
      %205 = vmatpush1.msra.mxu0 0.0
      %206 = vmatprep.subr.mxu0 0.0
      %207 = vmatpush1.msra.mxu0 0.0
      %208 = vmatprep.subr.mxu0 0.0
      %209 = vmatpush1.msra.mxu0 0.0
      %210 = vmatprep.subr.mxu0 0.0
      %211 = vmatpush1.msra.mxu0 0.0
      %212 = vmatprep.subr.mxu0 0.0
      %213 = vmatpush1.msra.mxu0 0.0
      %214 = vmatprep.subr.mxu0 0.0
      %215 = vmatpush1.msra.mxu0 0.0
      %216 = vmatprep.subr.mxu0 0.0
      %217 = vmatpush1.msra.mxu0 0.0
      %218 = vmatprep.subr.mxu0 0.0
      %219 = vmatpush1.msra.mxu0 0.0
      %220 = vmatprep.subr.mxu0 0.0
      %221 = vmatpush1.msra.mxu0 0.0
      %222 = vmatprep.subr.mxu0 0.0
      %v223 = vand.u32 %v172, 4294901760
      %224 = vmatpush1.msra.mxu0 %v223
      %225 = vmatprep.subr.mxu0 0.0
      %v226 = vand.u32 %v171, 4294901760
      %227 = vmatpush1.msra.mxu0 %v226
      %228 = vmatprep.subr.mxu0 0.0
      %229 = vmatpush2.msra.mxu0 0.0
      %230 = vmatprep.subr.mxu0 0.0
      %231 = vmatpush2.msra.mxu0 0.0
      %232 = vmatprep.subr.mxu0 0.0
      %233 = vmatpush2.msra.mxu0 0.0
      %234 = vmatprep.subr.mxu0 0.0
      %235 = vmatpush2.msra.mxu0 0.0
      %236 = vmatprep.subr.mxu0 0.0
      %237 = vmatpush2.msra.mxu0 0.0
      %238 = vmatprep.subr.mxu0 0.0
      %239 = vmatpush2.msra.mxu0 0.0
      %240 = vmatprep.subr.mxu0 0.0
      %241 = vmatpush2.msra.mxu0 0.0
      %242 = vmatprep.subr.mxu0 0.0
      %243 = vmatpush2.msra.mxu0 0.0
      %244 = vmatprep.subr.mxu0 0.0
      %245 = vmatpush2.msra.mxu0 0.0
      %246 = vmatprep.subr.mxu0 0.0
      %247 = vmatpush2.msra.mxu0 0.0
      %248 = vmatprep.subr.mxu0 0.0
      %249 = vmatpush2.msra.mxu0 0.0
      %250 = vmatprep.subr.mxu0 0.0
      %251 = vmatpush2.msra.mxu0 0.0
      %252 = vmatprep.subr.mxu0 0.0
      %253 = vmatpush2.msra.mxu0 0.0
      %254 = vmatprep.subr.mxu0 0.0
      %255 = vmatpush2.msra.mxu0 0.0
      %256 = vmatprep.subr.mxu0 0.0
      %257 = vmatpush2.msra.mxu0 0.0
      %258 = vmatprep.subr.mxu0 0.0
      %259 = vmatpush2.msra.mxu0 0.0
      %260 = vmatprep.mubr.f32.mxu0 0.0
      %v261 = vand.u32 %v189, 4294901760
      %v262 = vsub.f32 %v189, %v261
      %v263 = vand.u32 %v262, 4294901760
      %v264 = vsub.f32 %v262, %v263
      %v265 = vand.u32 %v264, 4294901760
      %266 = vmatmul.mubr.f32.gmra.mxu0 %v265
      %v267 = vpop.f32.mrf.mxu0
      %v268 = vadd.f32 %v180, %v267
      %v269 = vpop.f32.mrf.mxu0
      %270 = vmatprep.mubr.f32.mxu0 0.0
      %v271 = vand.u32 %v192, 4294901760
      %v272 = vsub.f32 %v192, %v271
      %v273 = vand.u32 %v272, 4294901760
      %v274 = vsub.f32 %v272, %v273
      %v275 = vand.u32 %v274, 4294901760
      %276 = vmatmul.mubr.f32.gmra.mxu0 %v275
      %v277 = vpop.f32.mrf.mxu0
      %v278 = vadd.f32 %v185, %v277
      %v279 = vpop.f32.mrf.mxu0
      %280 = vdwg.mxu0
      %281 = vmatprep.subr.mxu0 0.0
      %282 = vmatpush1.msra.mxu0 0.0
      %283 = vmatprep.subr.mxu0 0.0
      %284 = vmatpush1.msra.mxu0 0.0
      %285 = vmatprep.subr.mxu0 0.0
      %286 = vmatpush1.msra.mxu0 0.0
      %287 = vmatprep.subr.mxu0 0.0
      %288 = vmatpush1.msra.mxu0 0.0
      %289 = vmatprep.subr.mxu0 0.0
      %290 = vmatpush1.msra.mxu0 0.0
      %291 = vmatprep.subr.mxu0 0.0
      %292 = vmatpush1.msra.mxu0 0.0
      %293 = vmatprep.subr.mxu0 0.0
      %294 = vmatpush1.msra.mxu0 0.0
      %295 = vmatprep.subr.mxu0 0.0
      %296 = vmatpush1.msra.mxu0 0.0
      %297 = vmatprep.subr.mxu0 0.0
      %298 = vmatpush1.msra.mxu0 0.0
      %299 = vmatprep.subr.mxu0 0.0
      %300 = vmatpush1.msra.mxu0 0.0
      %301 = vmatprep.subr.mxu0 0.0
      %302 = vmatpush1.msra.mxu0 0.0
      %303 = vmatprep.subr.mxu0 0.0
      %304 = vmatpush1.msra.mxu0 0.0
      %305 = vmatprep.subr.mxu0 0.0
      %306 = vmatpush1.msra.mxu0 0.0
      %307 = vmatprep.subr.mxu0 0.0
      %308 = vmatpush1.msra.mxu0 0.0
      %309 = vmatprep.subr.mxu0 0.0
      %v310 = vand.u32 %v172, 4294901760
      %v311 = vsub.f32 %v172, %v310
      %v312 = vand.u32 %v311, 4294901760
      %v313 = vsub.f32 %v311, %v312
      %v314 = vand.u32 %v313, 4294901760
      %315 = vmatpush1.msra.mxu0 %v314
      %316 = vmatprep.subr.mxu0 0.0
      %v317 = vand.u32 %v171, 4294901760
      %v318 = vsub.f32 %v171, %v317
      %v319 = vand.u32 %v318, 4294901760
      %v320 = vsub.f32 %v318, %v319
      %v321 = vand.u32 %v320, 4294901760
      %322 = vmatpush1.msra.mxu0 %v321
      %323 = vmatprep.subr.mxu0 0.0
      %324 = vmatpush2.msra.mxu0 0.0
      %325 = vmatprep.subr.mxu0 0.0
      %326 = vmatpush2.msra.mxu0 0.0
      %327 = vmatprep.subr.mxu0 0.0
      %328 = vmatpush2.msra.mxu0 0.0
      %329 = vmatprep.subr.mxu0 0.0
      %330 = vmatpush2.msra.mxu0 0.0
      %331 = vmatprep.subr.mxu0 0.0
      %332 = vmatpush2.msra.mxu0 0.0
      %333 = vmatprep.subr.mxu0 0.0
      %334 = vmatpush2.msra.mxu0 0.0
      %335 = vmatprep.subr.mxu0 0.0
      %336 = vmatpush2.msra.mxu0 0.0
      %337 = vmatprep.subr.mxu0 0.0
      %338 = vmatpush2.msra.mxu0 0.0
      %339 = vmatprep.subr.mxu0 0.0
      %340 = vmatpush2.msra.mxu0 0.0
      %341 = vmatprep.subr.mxu0 0.0
      %342 = vmatpush2.msra.mxu0 0.0
      %343 = vmatprep.subr.mxu0 0.0
      %344 = vmatpush2.msra.mxu0 0.0
      %345 = vmatprep.subr.mxu0 0.0
      %346 = vmatpush2.msra.mxu0 0.0
      %347 = vmatprep.subr.mxu0 0.0
      %348 = vmatpush2.msra.mxu0 0.0
      %349 = vmatprep.subr.mxu0 0.0
      %350 = vmatpush2.msra.mxu0 0.0
      %351 = vmatprep.subr.mxu0 0.0
      %352 = vmatpush2.msra.mxu0 0.0
      %353 = vmatprep.subr.mxu0 0.0
      %354 = vmatpush2.msra.mxu0 0.0
      %355 = vmatprep.mubr.f32.mxu0 0.0
      %v356 = vand.u32 %v189, 4294901760
      %357 = vmatmul.mubr.f32.gmra.mxu0 %v356
      %v358 = vpop.f32.mrf.mxu0
      %v359 = vadd.f32 %v268, %v358
      %v360 = vpop.f32.mrf.mxu0
      %361 = vmatprep.mubr.f32.mxu0 0.0
      %v362 = vand.u32 %v192, 4294901760
      %363 = vmatmul.mubr.f32.gmra.mxu0 %v362
      %v364 = vpop.f32.mrf.mxu0
      %v365 = vadd.f32 %v278, %v364
      %v366 = vpop.f32.mrf.mxu0
      %367 = vdwg.mxu0
      %368 = vmatprep.subr.mxu0 0.0
      %369 = vmatpush1.msra.mxu0 0.0
      %370 = vmatprep.subr.mxu0 0.0
      %371 = vmatpush1.msra.mxu0 0.0
      %372 = vmatprep.subr.mxu0 0.0
      %373 = vmatpush1.msra.mxu0 0.0
      %374 = vmatprep.subr.mxu0 0.0
      %375 = vmatpush1.msra.mxu0 0.0
      %376 = vmatprep.subr.mxu0 0.0
      %377 = vmatpush1.msra.mxu0 0.0
      %378 = vmatprep.subr.mxu0 0.0
      %379 = vmatpush1.msra.mxu0 0.0
      %380 = vmatprep.subr.mxu0 0.0
      %381 = vmatpush1.msra.mxu0 0.0
      %382 = vmatprep.subr.mxu0 0.0
      %383 = vmatpush1.msra.mxu0 0.0
      %384 = vmatprep.subr.mxu0 0.0
      %385 = vmatpush1.msra.mxu0 0.0
      %386 = vmatprep.subr.mxu0 0.0
      %387 = vmatpush1.msra.mxu0 0.0
      %388 = vmatprep.subr.mxu0 0.0
      %389 = vmatpush1.msra.mxu0 0.0
      %390 = vmatprep.subr.mxu0 0.0
      %391 = vmatpush1.msra.mxu0 0.0
      %392 = vmatprep.subr.mxu0 0.0
      %393 = vmatpush1.msra.mxu0 0.0
      %394 = vmatprep.subr.mxu0 0.0
      %395 = vmatpush1.msra.mxu0 0.0
      %396 = vmatprep.subr.mxu0 0.0
      %v397 = vand.u32 %v172, 4294901760
      %v398 = vsub.f32 %v172, %v397
      %399 = vmatpush1.msra.mxu0 %v398
      %400 = vmatprep.subr.mxu0 0.0
      %v401 = vand.u32 %v171, 4294901760
      %v402 = vsub.f32 %v171, %v401
      %403 = vmatpush1.msra.mxu0 %v402
      %404 = vmatprep.subr.mxu0 0.0
      %405 = vmatpush2.msra.mxu0 0.0
      %406 = vmatprep.subr.mxu0 0.0
      %407 = vmatpush2.msra.mxu0 0.0
      %408 = vmatprep.subr.mxu0 0.0
      %409 = vmatpush2.msra.mxu0 0.0
      %410 = vmatprep.subr.mxu0 0.0
      %411 = vmatpush2.msra.mxu0 0.0
      %412 = vmatprep.subr.mxu0 0.0
      %413 = vmatpush2.msra.mxu0 0.0
      %414 = vmatprep.subr.mxu0 0.0
      %415 = vmatpush2.msra.mxu0 0.0
      %416 = vmatprep.subr.mxu0 0.0
      %417 = vmatpush2.msra.mxu0 0.0
      %418 = vmatprep.subr.mxu0 0.0
      %419 = vmatpush2.msra.mxu0 0.0
      %420 = vmatprep.subr.mxu0 0.0
      %421 = vmatpush2.msra.mxu0 0.0
      %422 = vmatprep.subr.mxu0 0.0
      %423 = vmatpush2.msra.mxu0 0.0
      %424 = vmatprep.subr.mxu0 0.0
      %425 = vmatpush2.msra.mxu0 0.0
      %426 = vmatprep.subr.mxu0 0.0
      %427 = vmatpush2.msra.mxu0 0.0
      %428 = vmatprep.subr.mxu0 0.0
      %429 = vmatpush2.msra.mxu0 0.0
      %430 = vmatprep.subr.mxu0 0.0
      %431 = vmatpush2.msra.mxu0 0.0
      %432 = vmatprep.subr.mxu0 0.0
      %433 = vmatpush2.msra.mxu0 0.0
      %434 = vmatprep.subr.mxu0 0.0
      %435 = vmatpush2.msra.mxu0 0.0
      %436 = vmatprep.mubr.f32.mxu0 0.0
      %v437 = vand.u32 %v189, 4294901760
      %v438 = vsub.f32 %v189, %v437
      %439 = vmatmul.mubr.f32.gmra.mxu0 %v438
      %v440 = vpop.f32.mrf.mxu0
      %v441 = vadd.f32 %v359, %v440
      %v442 = vpop.f32.mrf.mxu0
      %443 = vmatprep.mubr.f32.mxu0 0.0
      %v444 = vand.u32 %v192, 4294901760
      %v445 = vsub.f32 %v192, %v444
      %446 = vmatmul.mubr.f32.gmra.mxu0 %v445
      %v447 = vpop.f32.mrf.mxu0
      %v448 = vadd.f32 %v365, %v447
      %v449 = vpop.f32.mrf.mxu0
      %450 = vdwg.mxu0
      %451 = vmatprep.subr.mxu0 0.0
      %452 = vmatpush1.msra.mxu0 0.0
      %453 = vmatprep.subr.mxu0 0.0
      %454 = vmatpush1.msra.mxu0 0.0
      %455 = vmatprep.subr.mxu0 0.0
      %456 = vmatpush1.msra.mxu0 0.0
      %457 = vmatprep.subr.mxu0 0.0
      %458 = vmatpush1.msra.mxu0 0.0
      %459 = vmatprep.subr.mxu0 0.0
      %460 = vmatpush1.msra.mxu0 0.0
      %461 = vmatprep.subr.mxu0 0.0
      %462 = vmatpush1.msra.mxu0 0.0
      %463 = vmatprep.subr.mxu0 0.0
      %464 = vmatpush1.msra.mxu0 0.0
      %465 = vmatprep.subr.mxu0 0.0
      %466 = vmatpush1.msra.mxu0 0.0
      %467 = vmatprep.subr.mxu0 0.0
      %468 = vmatpush1.msra.mxu0 0.0
      %469 = vmatprep.subr.mxu0 0.0
      %470 = vmatpush1.msra.mxu0 0.0
      %471 = vmatprep.subr.mxu0 0.0
      %472 = vmatpush1.msra.mxu0 0.0
      %473 = vmatprep.subr.mxu0 0.0
      %474 = vmatpush1.msra.mxu0 0.0
      %475 = vmatprep.subr.mxu0 0.0
      %476 = vmatpush1.msra.mxu0 0.0
      %477 = vmatprep.subr.mxu0 0.0
      %478 = vmatpush1.msra.mxu0 0.0
      %479 = vmatprep.subr.mxu0 0.0
      %v480 = vand.u32 %v172, 4294901760
      %481 = vmatpush1.msra.mxu0 %v480
      %482 = vmatprep.subr.mxu0 0.0
      %v483 = vand.u32 %v171, 4294901760
      %484 = vmatpush1.msra.mxu0 %v483
      %485 = vmatprep.subr.mxu0 0.0
      %486 = vmatpush2.msra.mxu0 0.0
      %487 = vmatprep.subr.mxu0 0.0
      %488 = vmatpush2.msra.mxu0 0.0
      %489 = vmatprep.subr.mxu0 0.0
      %490 = vmatpush2.msra.mxu0 0.0
      %491 = vmatprep.subr.mxu0 0.0
      %492 = vmatpush2.msra.mxu0 0.0
      %493 = vmatprep.subr.mxu0 0.0
      %494 = vmatpush2.msra.mxu0 0.0
      %495 = vmatprep.subr.mxu0 0.0
      %496 = vmatpush2.msra.mxu0 0.0
      %497 = vmatprep.subr.mxu0 0.0
      %498 = vmatpush2.msra.mxu0 0.0
      %499 = vmatprep.subr.mxu0 0.0
      %500 = vmatpush2.msra.mxu0 0.0
      %501 = vmatprep.subr.mxu0 0.0
      %502 = vmatpush2.msra.mxu0 0.0
      %503 = vmatprep.subr.mxu0 0.0
      %504 = vmatpush2.msra.mxu0 0.0
      %505 = vmatprep.subr.mxu0 0.0
      %506 = vmatpush2.msra.mxu0 0.0
      %507 = vmatprep.subr.mxu0 0.0
      %508 = vmatpush2.msra.mxu0 0.0
      %509 = vmatprep.subr.mxu0 0.0
      %510 = vmatpush2.msra.mxu0 0.0
      %511 = vmatprep.subr.mxu0 0.0
      %512 = vmatpush2.msra.mxu0 0.0
      %513 = vmatprep.subr.mxu0 0.0
      %514 = vmatpush2.msra.mxu0 0.0
      %515 = vmatprep.subr.mxu0 0.0
      %516 = vmatpush2.msra.mxu0 0.0
      %517 = vmatprep.mubr.f32.mxu0 0.0
      %v518 = vand.u32 %v189, 4294901760
      %v519 = vsub.f32 %v189, %v518
      %v520 = vand.u32 %v519, 4294901760
      %521 = vmatmul.mubr.f32.gmra.mxu0 %v520
      %v522 = vpop.f32.mrf.mxu0
      %v523 = vadd.f32 %v441, %v522
      %v524 = vpop.f32.mrf.mxu0
      %525 = vmatprep.mubr.f32.mxu0 0.0
      %v526 = vand.u32 %v192, 4294901760
      %v527 = vsub.f32 %v192, %v526
      %v528 = vand.u32 %v527, 4294901760
      %529 = vmatmul.mubr.f32.gmra.mxu0 %v528
      %v530 = vpop.f32.mrf.mxu0
      %v531 = vadd.f32 %v448, %v530
      %v532 = vpop.f32.mrf.mxu0
      %533 = vdwg.mxu0
      %534 = vmatprep.subr.mxu0 0.0
      %535 = vmatpush1.msra.mxu0 0.0
      %536 = vmatprep.subr.mxu0 0.0
      %537 = vmatpush1.msra.mxu0 0.0
      %538 = vmatprep.subr.mxu0 0.0
      %539 = vmatpush1.msra.mxu0 0.0
      %540 = vmatprep.subr.mxu0 0.0
      %541 = vmatpush1.msra.mxu0 0.0
      %542 = vmatprep.subr.mxu0 0.0
      %543 = vmatpush1.msra.mxu0 0.0
      %544 = vmatprep.subr.mxu0 0.0
      %545 = vmatpush1.msra.mxu0 0.0
      %546 = vmatprep.subr.mxu0 0.0
      %547 = vmatpush1.msra.mxu0 0.0
      %548 = vmatprep.subr.mxu0 0.0
      %549 = vmatpush1.msra.mxu0 0.0
      %550 = vmatprep.subr.mxu0 0.0
      %551 = vmatpush1.msra.mxu0 0.0
      %552 = vmatprep.subr.mxu0 0.0
      %553 = vmatpush1.msra.mxu0 0.0
      %554 = vmatprep.subr.mxu0 0.0
      %555 = vmatpush1.msra.mxu0 0.0
      %556 = vmatprep.subr.mxu0 0.0
      %557 = vmatpush1.msra.mxu0 0.0
      %558 = vmatprep.subr.mxu0 0.0
      %559 = vmatpush1.msra.mxu0 0.0
      %560 = vmatprep.subr.mxu0 0.0
      %561 = vmatpush1.msra.mxu0 0.0
      %562 = vmatprep.subr.mxu0 0.0
      %v563 = vand.u32 %v172, 4294901760
      %v564 = vsub.f32 %v172, %v563
      %v565 = vand.u32 %v564, 4294901760
      %566 = vmatpush1.msra.mxu0 %v565
      %567 = vmatprep.subr.mxu0 0.0
      %v568 = vand.u32 %v171, 4294901760
      %v569 = vsub.f32 %v171, %v568
      %v570 = vand.u32 %v569, 4294901760
      %571 = vmatpush1.msra.mxu0 %v570
      %572 = vmatprep.subr.mxu0 0.0
      %573 = vmatpush2.msra.mxu0 0.0
      %574 = vmatprep.subr.mxu0 0.0
      %575 = vmatpush2.msra.mxu0 0.0
      %576 = vmatprep.subr.mxu0 0.0
      %577 = vmatpush2.msra.mxu0 0.0
      %578 = vmatprep.subr.mxu0 0.0
      %579 = vmatpush2.msra.mxu0 0.0
      %580 = vmatprep.subr.mxu0 0.0
      %581 = vmatpush2.msra.mxu0 0.0
      %582 = vmatprep.subr.mxu0 0.0
      %583 = vmatpush2.msra.mxu0 0.0
      %584 = vmatprep.subr.mxu0 0.0
      %585 = vmatpush2.msra.mxu0 0.0
      %586 = vmatprep.subr.mxu0 0.0
      %587 = vmatpush2.msra.mxu0 0.0
      %588 = vmatprep.subr.mxu0 0.0
      %589 = vmatpush2.msra.mxu0 0.0
      %590 = vmatprep.subr.mxu0 0.0
      %591 = vmatpush2.msra.mxu0 0.0
      %592 = vmatprep.subr.mxu0 0.0
      %593 = vmatpush2.msra.mxu0 0.0
      %594 = vmatprep.subr.mxu0 0.0
      %595 = vmatpush2.msra.mxu0 0.0
      %596 = vmatprep.subr.mxu0 0.0
      %597 = vmatpush2.msra.mxu0 0.0
      %598 = vmatprep.subr.mxu0 0.0
      %599 = vmatpush2.msra.mxu0 0.0
      %600 = vmatprep.subr.mxu0 0.0
      %601 = vmatpush2.msra.mxu0 0.0
      %602 = vmatprep.subr.mxu0 0.0
      %603 = vmatpush2.msra.mxu0 0.0
      %604 = vmatprep.mubr.f32.mxu0 0.0
      %v605 = vand.u32 %v189, 4294901760
      %606 = vmatmul.mubr.f32.gmra.mxu0 %v605
      %v607 = vpop.f32.mrf.mxu0
      %v608 = vadd.f32 %v523, %v607
      %v609 = vpop.f32.mrf.mxu0
      %610 = vmatprep.mubr.f32.mxu0 0.0
      %v611 = vand.u32 %v192, 4294901760
      %612 = vmatmul.mubr.f32.gmra.mxu0 %v611
      %v613 = vpop.f32.mrf.mxu0
      %v614 = vadd.f32 %v531, %v613
      %v615 = vpop.f32.mrf.mxu0
      %616 = vdwg.mxu0
      %617 = vmatprep.subr.mxu0 0.0
      %618 = vmatpush1.msra.mxu0 0.0
      %619 = vmatprep.subr.mxu0 0.0
      %620 = vmatpush1.msra.mxu0 0.0
      %621 = vmatprep.subr.mxu0 0.0
      %622 = vmatpush1.msra.mxu0 0.0
      %623 = vmatprep.subr.mxu0 0.0
      %624 = vmatpush1.msra.mxu0 0.0
      %625 = vmatprep.subr.mxu0 0.0
      %626 = vmatpush1.msra.mxu0 0.0
      %627 = vmatprep.subr.mxu0 0.0
      %628 = vmatpush1.msra.mxu0 0.0
      %629 = vmatprep.subr.mxu0 0.0
      %630 = vmatpush1.msra.mxu0 0.0
      %631 = vmatprep.subr.mxu0 0.0
      %632 = vmatpush1.msra.mxu0 0.0
      %633 = vmatprep.subr.mxu0 0.0
      %634 = vmatpush1.msra.mxu0 0.0
      %635 = vmatprep.subr.mxu0 0.0
      %636 = vmatpush1.msra.mxu0 0.0
      %637 = vmatprep.subr.mxu0 0.0
      %638 = vmatpush1.msra.mxu0 0.0
      %639 = vmatprep.subr.mxu0 0.0
      %640 = vmatpush1.msra.mxu0 0.0
      %641 = vmatprep.subr.mxu0 0.0
      %642 = vmatpush1.msra.mxu0 0.0
      %643 = vmatprep.subr.mxu0 0.0
      %644 = vmatpush1.msra.mxu0 0.0
      %645 = vmatprep.subr.mxu0 0.0
      %v646 = vand.u32 %v172, 4294901760
      %647 = vmatpush1.msra.mxu0 %v646
      %648 = vmatprep.subr.mxu0 0.0
      %v649 = vand.u32 %v171, 4294901760
      %650 = vmatpush1.msra.mxu0 %v649
      %651 = vmatprep.subr.mxu0 0.0
      %652 = vmatpush2.msra.mxu0 0.0
      %653 = vmatprep.subr.mxu0 0.0
      %654 = vmatpush2.msra.mxu0 0.0
      %655 = vmatprep.subr.mxu0 0.0
      %656 = vmatpush2.msra.mxu0 0.0
      %657 = vmatprep.subr.mxu0 0.0
      %658 = vmatpush2.msra.mxu0 0.0
      %659 = vmatprep.subr.mxu0 0.0
      %660 = vmatpush2.msra.mxu0 0.0
      %661 = vmatprep.subr.mxu0 0.0
      %662 = vmatpush2.msra.mxu0 0.0
      %663 = vmatprep.subr.mxu0 0.0
      %664 = vmatpush2.msra.mxu0 0.0
      %665 = vmatprep.subr.mxu0 0.0
      %666 = vmatpush2.msra.mxu0 0.0
      %667 = vmatprep.subr.mxu0 0.0
      %668 = vmatpush2.msra.mxu0 0.0
      %669 = vmatprep.subr.mxu0 0.0
      %670 = vmatpush2.msra.mxu0 0.0
      %671 = vmatprep.subr.mxu0 0.0
      %672 = vmatpush2.msra.mxu0 0.0
      %673 = vmatprep.subr.mxu0 0.0
      %674 = vmatpush2.msra.mxu0 0.0
      %675 = vmatprep.subr.mxu0 0.0
      %676 = vmatpush2.msra.mxu0 0.0
      %677 = vmatprep.subr.mxu0 0.0
      %678 = vmatpush2.msra.mxu0 0.0
      %679 = vmatprep.subr.mxu0 0.0
      %680 = vmatpush2.msra.mxu0 0.0
      %681 = vmatprep.subr.mxu0 0.0
      %682 = vmatpush2.msra.mxu0 0.0
      %683 = vmatprep.mubr.f32.mxu0 0.0
      %v684 = vand.u32 %v189, 4294901760
      %685 = vmatmul.mubr.f32.gmra.mxu0 %v684
      %v686 = vpop.f32.mrf.mxu0
      %v687 = vadd.f32 %v608, %v686
      %v688 = vpop.f32.mrf.mxu0
      %689 = vmatprep.mubr.f32.mxu0 0.0
      %v690 = vand.u32 %v192, 4294901760
      %691 = vmatmul.mubr.f32.gmra.mxu0 %v690
      %v692 = vpop.f32.mrf.mxu0
      %v693 = vadd.f32 %v614, %v692
      %v694 = vpop.f32.mrf.mxu0
      %695 = vdwg.mxu0
      %v696 = vmax.f32 %v687, 0.0
      %v697 = vmax.f32 %v693, 0.0
      %vm698 = vcmask 64512
      %699 = vst.msk [vmem:[%s170] sm:$0xff] %vm698, %v696
      %700 = vst.msk [vmem:[%s170 + $0x8] sm:$0xff] %vm698, %v697
      %p701 = scmp.lt.s32.totalorder %s14, 1
      %s702 = scalar_select %p701, %s14, 1
      %s703 = smul.addr %s702, 2
      %s704 = smul.addr %s703, 8
      %s705 = scalar_lea.vmem %s3, %s704
      // Predicated region
      $region33: #{tpu_custom_call.1} parent=31 // pred_check
        %p706 = pneg %p100
      $region34: #{tpu_custom_call.1} parent=31 // pred_check_branch
        %708 = sbr.rel (%p706) target = $region36
      $region35: #{tpu_custom_call.1} parent=31 // pred_region
        _
      $region36: #{tpu_custom_call.1} parent=31 // pred_fallthru
        _
    $region32: #{tpu_custom_call.1} parent=5 // pred_fallthru
      _
    %p709 = scmp.le.s32.totalorder 2, %s9
    // Predicated region
    $region37: #{tpu_custom_call.1} parent=5 // pred_check
      %p710 = pneg %p709
    $region38: #{tpu_custom_call.1} parent=5 // pred_check_branch
      %712 = sbr.rel (%p710) target = $region40
    $region39: #{tpu_custom_call.1} parent=5 // pred_region
      %s713 = ssub.s32 %s9, 2
      // Predicated region
      $region41: #{tpu_custom_call.1} parent=39 // pred_check
        %p714 = pneg %p106
      $region42: #{tpu_custom_call.1} parent=39 // pred_check_branch
        %716 = sbr.rel (%p714) target = $region44
      $region43: #{tpu_custom_call.1} parent=39 // pred_region
        %p717 = scmp.lt.s32.totalorder %s15, 1
        %s718 = scalar_select %p717, %s15, 1
        %s719 = smul.addr %s718, 2
        %s720 = smul.addr %s719, 8
        %s721 = scalar_lea.vmem %s3, %s720
      $region44: #{tpu_custom_call.1} parent=39 // pred_fallthru
        _
    $region40: #{tpu_custom_call.1} parent=5 // pred_fallthru
      _
  $region6: #{tpu_custom_call.1} parent=0 // loop_footer
    %s13 = sadd.s32 1, %s9
  $region7: #{tpu_custom_call.1} parent=0 // loop_footer_branch
    %8 = sbr.rel target = $region3
  $region8: #{tpu_custom_call.1} parent=0 // loop_exit
    _

</llo_original>
